<compile_context>
chip_gen: v5e
topology: v5e:2x2
jax: 0.10.0
libtpu: 0.0.40
codegen_flags: <defaults>
</compile_context>

<pallas_src>
import functools

import jax
import jax.numpy as jnp
from jax.experimental import pallas as pl
from jax.experimental.pallas import tpu as pltpu

_NEG_SLOPE = 0.01                         # PyTorch LeakyReLU default
_VMEM_LIMIT = 32 * 1024 * 1024            # explicit scoped-VMEM limit (headroom)
_FUSED_BLOCK_BUDGET = 8 * 1024 * 1024     # (in + out block) * 2 double buffers


def _leaky_relu(x):
    return jnp.where(x >= 0, x, _NEG_SLOPE * x)


def _mlp_att(avg, mx, w1t, b1, w2t, b2):
    """avg, mx: (1, C) f32 -> sigmoid channel attention (1, C) f32.

    Both MLP branches are fused into one (2, C) matmul pair (halves MXU pushes
    and the bias/leaky epilogue).
    """
    v = jnp.concatenate([avg, mx], axis=0)                           # (2, C)
    h = jnp.dot(v, w1t, preferred_element_type=jnp.float32) + b1     # (2, H)
    h = _leaky_relu(h)
    o = jnp.dot(h, w2t, preferred_element_type=jnp.float32) + b2     # (2, C)
    return jax.nn.sigmoid(o[0:1, :] + o[1:2, :])                     # (1, C)


# --------------- fused single-pass kernel (grid over batch) ------------------

def _fused_kernel(x_ref, w1t_ref, b1_ref, w2t_ref, b2_ref, o_ref):
    x = x_ref[...].astype(jnp.float32)                 # (1, C, L)
    avg = jnp.mean(x, axis=-1)                         # (1, C)
    mx = jnp.max(x, axis=-1)                           # (1, C)
    att = _mlp_att(avg, mx, w1t_ref[...], b1_ref[...], w2t_ref[...], b2_ref[...])
    o_ref[...] = (x * att[:, :, None]).astype(o_ref.dtype)


# --------------- two-pass fallback: reduce -> scale ---------------------------

def _reduce_kernel(x_ref, w1t_ref, b1_ref, w2t_ref, b2_ref, att_ref,
                   sum_sc, max_sc, *, length):
    li = pl.program_id(1)
    n_l = pl.num_programs(1)

    x = x_ref[...].astype(jnp.float32)                 # (1, C, Lt)
    l_tile = x.shape[-1]
    pos = li * l_tile + jax.lax.broadcasted_iota(jnp.int32, x.shape, 2)
    valid = pos < length                               # mask ragged tail tile
    x_sum = jnp.where(valid, x, 0.0)
    x_max = jnp.where(valid, x, -jnp.inf)

    @pl.when(li == 0)
    def _init():
        sum_sc[...] = jnp.zeros_like(sum_sc)
        max_sc[...] = jnp.full_like(max_sc, -jnp.inf)

    sum_sc[...] += jnp.sum(x_sum, axis=-1)
    max_sc[...] = jnp.maximum(max_sc[...], jnp.max(x_max, axis=-1))

    @pl.when(li == n_l - 1)
    def _finalize():
        avg = sum_sc[...] * (1.0 / float(length))
        att = _mlp_att(avg, max_sc[...], w1t_ref[...], b1_ref[...],
                       w2t_ref[...], b2_ref[...])
        att_ref[...] = att[:, :, None].astype(att_ref.dtype)   # (1, C, 1)


def _scale_kernel(x_ref, att_ref, o_ref):
    att = att_ref[...].astype(jnp.float32)             # (1, C, 1)
    o_ref[...] = (x_ref[...].astype(jnp.float32) * att).astype(o_ref.dtype)


# --------------- wrapper ------------------------------------------------------

def _pick_l_tile(C, L, itemsize):
    """Lane-dense (multiple of 128) L tile that fits the per-step VMEM budget."""
    if L <= 128:
        return L
    lt = max(128, (min(L, 2048) // 128) * 128)
    while lt > 128 and 4 * C * lt * itemsize > _FUSED_BLOCK_BUDGET:
        lt = max(128, ((lt // 2) // 128) * 128)
    return lt


def channel_attention(x, w1, b1, w2, b2, *, force_two_pass=False, l_tile=None):
    """x: (B, C, L); w1: (H, C); b1: (H,); w2: (C, H); b2: (C,)  [PyTorch Linear]."""
    B, C, L = x.shape
    H = w1.shape[0]
    itemsize = jnp.dtype(x.dtype).itemsize

    # Hoist the weight transposes to the host: the kernel consumes (in, out)
    # layouts so no in-kernel .T / XLU relayout of sub-tile shapes.
    w1t = jnp.asarray(w1, jnp.float32).T               # (C, H)
    w2t = jnp.asarray(w2, jnp.float32).T               # (H, C)
    b1_2d = jnp.asarray(b1, jnp.float32).reshape(1, H)
    b2_2d = jnp.asarray(b2, jnp.float32).reshape(1, C)
    param_bytes = 4 * (2 * C * H + H + C)

    # Tiny resident parameter blocks (constant index_map -> fetched once).
    w_specs = [
        pl.BlockSpec((C, H), lambda *_: (0, 0)),
        pl.BlockSpec((1, H), lambda *_: (0, 0)),
        pl.BlockSpec((H, C), lambda *_: (0, 0)),
        pl.BlockSpec((1, C), lambda *_: (0, 0)),
    ]

    def params(sem):
        return pltpu.CompilerParams(dimension_semantics=sem,
                                    vmem_limit_bytes=_VMEM_LIMIT)

    use_fused = (not force_two_pass) and (
        4 * C * L * itemsize + param_bytes <= _FUSED_BLOCK_BUDGET)

    if use_fused:
        cost = pl.CostEstimate(
            flops=int(B * (3 * C * L + 8 * C * H)),
            transcendentals=int(B * C),
            bytes_accessed=int(2 * B * C * L * itemsize + param_bytes),
        )
        return pl.pallas_call(
            _fused_kernel,
            out_shape=jax.ShapeDtypeStruct((B, C, L), x.dtype),
            grid_spec=pltpu.PrefetchScalarGridSpec(
                num_scalar_prefetch=0,
                grid=(B,),
                in_specs=[pl.BlockSpec((1, C, L), lambda b: (b, 0, 0))] + w_specs,
                out_specs=pl.BlockSpec((1, C, L), lambda b: (b, 0, 0)),
            ),
            compiler_params=params(("parallel",)),
            cost_estimate=cost,
        )(x, w1t, b1_2d, w2t, b2_2d)

    # ---- two-pass: (1) pooled reduction + MLP -> att, (2) tiled scale ----
    lt = l_tile if l_tile is not None else _pick_l_tile(C, L, itemsize)
    n_l = pl.cdiv(L, lt)

    reduce_cost = pl.CostEstimate(
        flops=int(B * (2 * C * L + 8 * C * H)),
        transcendentals=int(B * C),
        bytes_accessed=int(B * C * L * itemsize + param_bytes + B * C * 4),
    )
    att = pl.pallas_call(
        functools.partial(_reduce_kernel, length=L),
        out_shape=jax.ShapeDtypeStruct((B, C, 1), jnp.float32),
        grid_spec=pltpu.PrefetchScalarGridSpec(
            num_scalar_prefetch=0,
            grid=(B, n_l),                              # reduction axis last
            in_specs=[pl.BlockSpec((1, C, lt), lambda b, l: (b, 0, l))] + w_specs,
            out_specs=pl.BlockSpec((1, C, 1), lambda b, l: (b, 0, 0)),
            scratch_shapes=[pltpu.VMEM((1, C), jnp.float32),
                            pltpu.VMEM((1, C), jnp.float32)],
        ),
        compiler_params=params(("parallel", "arbitrary")),
        cost_estimate=reduce_cost,
    )(x, w1t, b1_2d, w2t, b2_2d)

    scale_cost = pl.CostEstimate(
        flops=int(B * C * L),
        transcendentals=0,
        bytes_accessed=int(2 * B * C * L * itemsize + B * C * 4),
    )
    return pl.pallas_call(
        _scale_kernel,
        out_shape=jax.ShapeDtypeStruct((B, C, L), x.dtype),
        grid_spec=pltpu.PrefetchScalarGridSpec(
            num_scalar_prefetch=0,
            grid=(B, n_l),
            in_specs=[pl.BlockSpec((1, C, lt), lambda b, l: (b, 0, l)),
                      pl.BlockSpec((1, C, 1), lambda b, l: (b, 0, 0))],
            out_specs=pl.BlockSpec((1, C, lt), lambda b, l: (b, 0, l)),
        ),
        compiler_params=params(("parallel", "parallel")),
        cost_estimate=scale_cost,
    )(x, att)


# --------------- pure-JAX reference ------------------------------------------

def channel_attention_ref(x, w1, b1, w2, b2):
    xf = x.astype(jnp.float32)
    avg = jnp.mean(xf, axis=-1)
    mx = jnp.max(xf, axis=-1)

    def mlp(v):
        h = v @ w1.astype(jnp.float32).T + b1
        h = jnp.where(h >= 0, h, _NEG_SLOPE * h)
        return h @ w2.astype(jnp.float32).T + b2

    att = jax.nn.sigmoid(mlp(avg) + mlp(mx))
    return (xf * att[:, :, None]).astype(x.dtype)


if __name__ == "__main__":
    key = jax.random.PRNGKey(0)
    B, C, L = 2, 64, 256
    reduction_ratio = 16
    H = C // reduction_ratio

    k_x, k_w1, k_b1, k_w2, k_b2, k_x2 = jax.random.split(key, 6)
    x = jax.random.normal(k_x, (B, C, L), dtype=jnp.float32)
    # PyTorch Linear shapes: weights are (out_features, in_features).
    w1 = jax.random.normal(k_w1, (H, C), dtype=jnp.float32) * 0.1
    b1 = jax.random.normal(k_b1, (H,), dtype=jnp.float32) * 0.1
    w2 = jax.random.normal(k_w2, (C, H), dtype=jnp.float32) * 0.1
    b2 = jax.random.normal(k_b2, (C,), dtype=jnp.float32) * 0.1

    # Fused single-pass path (grid over batch).
    out = jax.block_until_ready(channel_attention(x, w1, b1, w2, b2))
    ref = channel_attention_ref(x, w1, b1, w2, b2)
    assert out.shape == (B, C, L)
    assert jnp.allclose(out, ref, atol=2e-5, rtol=2e-5), "fused path mismatch"

    # Two-pass (reduce + scale) fallback, including a ragged L tail tile.
    L2 = 320  # not a multiple of the 128-lane tile -> exercises tail masking
    x2 = jax.random.normal(k_x2, (B, C, L2), dtype=jnp.float32)
    out2 = jax.block_until_ready(
        channel_attention(x2, w1, b1, w2, b2, force_two_pass=True, l_tile=128))
    ref2 = channel_attention_ref(x2, w1, b1, w2, b2)
    assert out2.shape == (B, C, L2)
    assert jnp.allclose(out2, ref2, atol=2e-5, rtol=2e-5), "two-pass mismatch"

    print("KERNEL_OK")
</pallas_src>

<mosaic_0001>
module attributes {stable_mosaic.version = 11 : i64} {
  func.func @_fused_kernel(%arg0: i32, %arg1: memref<1x64x256xf32, #tpu.memory_space<vmem>>, %arg2: memref<64x4xf32, #tpu.memory_space<vmem>>, %arg3: memref<1x4xf32, #tpu.memory_space<vmem>>, %arg4: memref<4x64xf32, #tpu.memory_space<vmem>>, %arg5: memref<1x64xf32, #tpu.memory_space<vmem>>, %arg6: memref<1x64x256xf32, #tpu.memory_space<vmem>>) attributes {dimension_semantics = [#tpu.dimension_semantics<parallel>], iteration_bounds = array<i64: 2>, scalar_prefetch = 0 : i64, scratch_operands = 0 : i64, tpu.core_type = #tpu.core_type<tc>, window_params = [{transform_indices = @transform_0, window_bounds = array<i64: 1, 64, 256>}, {pipeline_mode = #tpu.pipeline_mode<synchronous>, transform_indices = @transform_1, window_bounds = array<i64: 64, 4>}, {pipeline_mode = #tpu.pipeline_mode<synchronous>, transform_indices = @transform_2, window_bounds = array<i64: 1, 4>}, {pipeline_mode = #tpu.pipeline_mode<synchronous>, transform_indices = @transform_3, window_bounds = array<i64: 4, 64>}, {pipeline_mode = #tpu.pipeline_mode<synchronous>, transform_indices = @transform_4, window_bounds = array<i64: 1, 64>}, {transform_indices = @transform_5, window_bounds = array<i64: 1, 64, 256>}]} {
    %c0 = arith.constant 0 : index
    %c0_0 = arith.constant 0 : index
    %c0_1 = arith.constant 0 : index
    %0 = vector.load %arg1[%c0, %c0_0, %c0_1] : memref<1x64x256xf32, #tpu.memory_space<vmem>>, vector<1x64x256xf32>
    %cst = arith.constant dense<0.000000e+00> : vector<1x64xf32>
    %1 = vector.multi_reduction <add>, %0, %cst [2] : vector<1x64x256xf32> to vector<1x64xf32>
    %cst_2 = arith.constant 2.560000e+02 : f32
    %2 = vector.broadcast %cst_2 : f32 to vector<1x64xf32>
    %3 = arith.divf %1, %2 : vector<1x64xf32>
    %cst_3 = arith.constant dense<0xFF800000> : vector<1x64xf32>
    %4 = vector.multi_reduction <maximumf>, %0, %cst_3 [2] : vector<1x64x256xf32> to vector<1x64xf32>
    %c0_4 = arith.constant 0 : index
    %c0_5 = arith.constant 0 : index
    %5 = vector.load %arg2[%c0_4, %c0_5] : memref<64x4xf32, #tpu.memory_space<vmem>>, vector<64x4xf32>
    %c0_6 = arith.constant 0 : index
    %c0_7 = arith.constant 0 : index
    %6 = vector.load %arg3[%c0_6, %c0_7] : memref<1x4xf32, #tpu.memory_space<vmem>>, vector<1x4xf32>
    %c0_8 = arith.constant 0 : index
    %c0_9 = arith.constant 0 : index
    %7 = vector.load %arg4[%c0_8, %c0_9] : memref<4x64xf32, #tpu.memory_space<vmem>>, vector<4x64xf32>
    %c0_10 = arith.constant 0 : index
    %c0_11 = arith.constant 0 : index
    %8 = vector.load %arg5[%c0_10, %c0_11] : memref<1x64xf32, #tpu.memory_space<vmem>>, vector<1x64xf32>
    %9 = tpu.concatenate %3, %4 in 0 : vector<1x64xf32>, vector<1x64xf32> -> vector<2x64xf32>
    %cst_12 = arith.constant dense<0.000000e+00> : vector<2x4xf32>
    %10 = tpu.matmul %9, %5, %cst_12 {dimension_numbers = #tpu.dot_dimension_numbers<[1], [0], [0], [1], [0, 0, 1, 1], [], []>} : vector<2x64xf32>, vector<64x4xf32>, vector<2x4xf32> -> vector<2x4xf32>
    %11 = vector.broadcast %6 : vector<1x4xf32> to vector<2x4xf32>
    %12 = arith.addf %10, %11 : vector<2x4xf32>
    %cst_13 = arith.constant 0.000000e+00 : f32
    %13 = vector.broadcast %cst_13 : f32 to vector<2x4xf32>
    %14 = arith.cmpf oge, %12, %13 : vector<2x4xf32>
    %cst_14 = arith.constant 0.00999999977 : f32
    %15 = vector.broadcast %cst_14 : f32 to vector<2x4xf32>
    %16 = arith.mulf %15, %12 : vector<2x4xf32>
    %17 = arith.select %14, %12, %16 : vector<2x4xi1>, vector<2x4xf32>
    %cst_15 = arith.constant dense<0.000000e+00> : vector<2x64xf32>
    %18 = tpu.matmul %17, %7, %cst_15 {dimension_numbers = #tpu.dot_dimension_numbers<[1], [0], [0], [1], [0, 0, 1, 1], [], []>} : vector<2x4xf32>, vector<4x64xf32>, vector<2x64xf32> -> vector<2x64xf32>
    %19 = vector.broadcast %8 : vector<1x64xf32> to vector<2x64xf32>
    %20 = arith.addf %18, %19 : vector<2x64xf32>
    %21 = vector.extract_strided_slice %20 {offsets = [0, 0], sizes = [1, 64], strides = [1, 1]} : vector<2x64xf32> to vector<1x64xf32>
    %22 = vector.extract_strided_slice %20 {offsets = [1, 0], sizes = [1, 64], strides = [1, 1]} : vector<2x64xf32> to vector<1x64xf32>
    %23 = arith.addf %21, %22 : vector<1x64xf32>
    %24 = arith.negf %23 : vector<1x64xf32>
    %25 = math.exp %24 : vector<1x64xf32>
    %cst_16 = arith.constant 1.000000e+00 : f32
    %26 = vector.broadcast %cst_16 : f32 to vector<1x64xf32>
    %27 = arith.addf %26, %25 : vector<1x64xf32>
    %28 = arith.divf %26, %27 : vector<1x64xf32>
    %29 = vector.shape_cast %28 : vector<1x64xf32> to vector<1x64x1xf32>
    %30 = vector.broadcast %29 : vector<1x64x1xf32> to vector<1x64x256xf32>
    %31 = arith.mulf %0, %30 : vector<1x64x256xf32>
    %c0_17 = arith.constant 0 : index
    %c0_18 = arith.constant 0 : index
    %c0_19 = arith.constant 0 : index
    %32 = vector.load %arg6[%c0_17, %c0_18, %c0_19] : memref<1x64x256xf32, #tpu.memory_space<vmem>>, vector<1x64x256xf32>
    tpu.vector_store %arg6[%c0_17, %c0_18, %c0_19], %31 {strides = array<i32>} : memref<1x64x256xf32, #tpu.memory_space<vmem>>, vector<1x64x256xf32>,
    return
  }
  func.func @transform_0(%arg0: i32) -> (i32, i32, i32) {
    %c0_i32 = arith.constant 0 : i32
    %c0_i32_0 = arith.constant 0 : i32
    %c0_i32_1 = arith.constant 0 : i32
    return %arg0, %c0_i32, %c0_i32_0 : i32, i32, i32
  }
  func.func @transform_1(%arg0: i32) -> (i32, i32) {
    %c0_i32 = arith.constant 0 : i32
    %c0_i32_0 = arith.constant 0 : i32
    %c0_i32_1 = arith.constant 0 : i32
    return %c0_i32, %c0_i32_0 : i32, i32
  }
  func.func @transform_2(%arg0: i32) -> (i32, i32) {
    %c0_i32 = arith.constant 0 : i32
    %c0_i32_0 = arith.constant 0 : i32
    %c0_i32_1 = arith.constant 0 : i32
    return %c0_i32, %c0_i32_0 : i32, i32
  }
  func.func @transform_3(%arg0: i32) -> (i32, i32) {
    %c0_i32 = arith.constant 0 : i32
    %c0_i32_0 = arith.constant 0 : i32
    %c0_i32_1 = arith.constant 0 : i32
    return %c0_i32, %c0_i32_0 : i32, i32
  }
  func.func @transform_4(%arg0: i32) -> (i32, i32) {
    %c0_i32 = arith.constant 0 : i32
    %c0_i32_0 = arith.constant 0 : i32
    %c0_i32_1 = arith.constant 0 : i32
    return %c0_i32, %c0_i32_0 : i32, i32
  }
  func.func @transform_5(%arg0: i32) -> (i32, i32, i32) {
    %c0_i32 = arith.constant 0 : i32
    %c0_i32_0 = arith.constant 0 : i32
    %c0_i32_1 = arith.constant 0 : i32
    return %arg0, %c0_i32, %c0_i32_0 : i32, i32, i32
  }
}

</mosaic_0001>

<llo_original>
// kernel: tpu_custom_call.1
$region0: #{tpu_custom_call.1}
  #allocation0 [shape = 'u32[]', space=smem, size = 0x4, offset = 0x4, fixed_abs, tag = 'smem constant byte address 0x4 - core index']
  #allocation1 [shape = 'u32[72,128]{1,0:T(1,128)}', space=vmem, size = 0x9000, scoped, tag = 'internal scratch']
  %s0 = inlined_call_operand.hbm [shape: f32[2,64,256], index: 0, kind: input, shape index: {}]
  %s1 = inlined_call_operand.vmem [shape: f32[64,4], index: 1, kind: input, shape index: {}]
  %s2 = inlined_call_operand.vmem [shape: f32[1,4], index: 2, kind: input, shape index: {}]
  %s3 = inlined_call_operand.vmem [shape: f32[4,64], index: 3, kind: input, shape index: {}]
  %s4 = inlined_call_operand.vmem [shape: f32[1,64], index: 4, kind: input, shape index: {}]
  %s5 = inlined_call_operand.hbm [shape: f32[2,64,256], index: 5, kind: output, shape index: {}]
  %s6 = sld [smem:[#allocation0]]
  $region57: #{tpu_custom_call.1} parent=0
    _
  %s8 = ssub.s32 1, %s6
  %s9 = scalar_select 0, %s8, %s6
  $region1: #{tpu_custom_call.1} parent=0
    #allocation2 [shape = 'u8[131072]{0}', space=vmem, size = 0x20000, scoped, tag = 'input window, operand 0']
    #allocation3 [shape = 's32[2]{0}', space=sflag, size = 0x8, scoped, tag = 'scoped memory for tpu_custom_call.1']
    #allocation4 [shape = 's32[2]{0}', space=sflag, size = 0x8, scoped, tag = 'scoped memory for tpu_custom_call.1']
    #allocation5 [shape = 'u8[131072]{0}', space=vmem, size = 0x20000, scoped, tag = 'output window, operand 0']
    %10 = vsyncpa [#allocation3], 0
    %s11 = scalar_lea.sflag [#allocation3], 1
    %12 = vsyncpa %s11, 0
    %13 = vsyncpa [#allocation4], 0
    %s14 = scalar_lea.sflag [#allocation4], 1
    %15 = vsyncpa %s14, 0
    loop: start=0, step=1, limit=4
    $region2: #{tpu_custom_call.1} parent=1 // loop_pre_header
      _
    $region3: #{tpu_custom_call.1} parent=1 // loop_header
      %s17 = sphi 0, %s21
      %p18 = scmp.ge.s32.totalorder %s17, 4
      %s27 = sphi 0, %s29
      %s30 = sphi 0, %s27
      %s31 = sphi 0, %s30
      %s47 = sphi 0, %s31
      %s51 = sphi 0, %s51
      %s53 = sphi 0, %s51
      %s54 = sphi 0, %s53
      %s68 = sphi 0, %s54
      %s72 = sphi 0, %s72
      %s74 = sphi 0, %s72
      %s75 = sphi 0, %s74
      %s89 = sphi 0, %s75
      %s93 = sphi 0, %s93
      %s95 = sphi 0, %s93
      %s96 = sphi 0, %s95
      %s110 = sphi 0, %s96
      %s114 = sphi 0, %s114
      %s116 = sphi 0, %s114
      %s117 = sphi 0, %s116
      %s131 = sphi 0, %s117
      %s137 = sphi 0, %s139
      %s140 = sphi 0, %s137
      %s141 = sphi 0, %s140
      %s157 = sphi 0, %s141
    $region4: #{tpu_custom_call.1} parent=1 // loop_header_branch
      %20 = sbr.rel (%p18) target = $region8
    $region5: #{tpu_custom_call.1} parent=1 // loop_body
      %s22 = ssub.s32 %s17, 1
      %s23 = ssub.s32 %s17, 2
      %s24 = sadd.s32 %s17, 1
      %s25 = ssub.s32 %s17, %s24
      %p26 = scmp.eq.s32.totalorder %s25, 0
      %s28 = sadd.s32 %s27, 1
      %s29 = scalar_select %p26, %s27, %s28
      %p32 = pneg %p26
      %p33 = scmp.eq.s32.totalorder %s17, 1
      %p34 = por %p32, %p33
      %p35 = scmp.ne.s32.totalorder %s27, %s30
      %p36 = scmp.eq.s32.totalorder %s17, 0
      %p37 = por %p35, %p36
      %p38 = scmp.ne.s32.totalorder %s27, %s30
      %p39 = scmp.eq.s32.totalorder %s22, 1
      %p40 = por %p38, %p39
      %p41 = scmp.ne.s32.totalorder %s30, %s31
      %p42 = scmp.eq.s32.totalorder %s22, 0
      %p43 = por %p41, %p42
      %p44 = scmp.ne.s32.totalorder %s30, %s31
      %p45 = scmp.eq.s32.totalorder %s23, 1
      %p46 = por %p44, %p45
      %p48 = scmp.ne.s32.totalorder %s31, %s47
      %p49 = scmp.eq.s32.totalorder %s23, 0
      %p50 = por %p48, %p49
      %s52 = sadd.s32 %s51, 1
      %p55 = scmp.eq.s32.totalorder %s17, 1
      %p56 = scmp.ne.s32.totalorder %s51, %s53
      %p57 = scmp.eq.s32.totalorder %s17, 0
      %p58 = por %p56, %p57
      %p59 = scmp.ne.s32.totalorder %s51, %s53
      %p60 = scmp.eq.s32.totalorder %s22, 1
      %p61 = por %p59, %p60
      %p62 = scmp.ne.s32.totalorder %s53, %s54
      %p63 = scmp.eq.s32.totalorder %s22, 0
      %p64 = por %p62, %p63
      %p65 = scmp.ne.s32.totalorder %s53, %s54
      %p66 = scmp.eq.s32.totalorder %s23, 1
      %p67 = por %p65, %p66
      %p69 = scmp.ne.s32.totalorder %s54, %s68
      %p70 = scmp.eq.s32.totalorder %s23, 0
      %p71 = por %p69, %p70
      %s73 = sadd.s32 %s72, 1
      %p76 = scmp.eq.s32.totalorder %s17, 1
      %p77 = scmp.ne.s32.totalorder %s72, %s74
      %p78 = scmp.eq.s32.totalorder %s17, 0
      %p79 = por %p77, %p78
      %p80 = scmp.ne.s32.totalorder %s72, %s74
      %p81 = scmp.eq.s32.totalorder %s22, 1
      %p82 = por %p80, %p81
      %p83 = scmp.ne.s32.totalorder %s74, %s75
      %p84 = scmp.eq.s32.totalorder %s22, 0
      %p85 = por %p83, %p84
      %p86 = scmp.ne.s32.totalorder %s74, %s75
      %p87 = scmp.eq.s32.totalorder %s23, 1
      %p88 = por %p86, %p87
      %p90 = scmp.ne.s32.totalorder %s75, %s89
      %p91 = scmp.eq.s32.totalorder %s23, 0
      %p92 = por %p90, %p91
      %s94 = sadd.s32 %s93, 1
      %p97 = scmp.eq.s32.totalorder %s17, 1
      %p98 = scmp.ne.s32.totalorder %s93, %s95
      %p99 = scmp.eq.s32.totalorder %s17, 0
      %p100 = por %p98, %p99
      %p101 = scmp.ne.s32.totalorder %s93, %s95
      %p102 = scmp.eq.s32.totalorder %s22, 1
      %p103 = por %p101, %p102
      %p104 = scmp.ne.s32.totalorder %s95, %s96
      %p105 = scmp.eq.s32.totalorder %s22, 0
      %p106 = por %p104, %p105
      %p107 = scmp.ne.s32.totalorder %s95, %s96
      %p108 = scmp.eq.s32.totalorder %s23, 1
      %p109 = por %p107, %p108
      %p111 = scmp.ne.s32.totalorder %s96, %s110
      %p112 = scmp.eq.s32.totalorder %s23, 0
      %p113 = por %p111, %p112
      %s115 = sadd.s32 %s114, 1
      %p118 = scmp.eq.s32.totalorder %s17, 1
      %p119 = scmp.ne.s32.totalorder %s114, %s116
      %p120 = scmp.eq.s32.totalorder %s17, 0
      %p121 = por %p119, %p120
      %p122 = scmp.ne.s32.totalorder %s114, %s116
      %p123 = scmp.eq.s32.totalorder %s22, 1
      %p124 = por %p122, %p123
      %p125 = scmp.ne.s32.totalorder %s116, %s117
      %p126 = scmp.eq.s32.totalorder %s22, 0
      %p127 = por %p125, %p126
      %p128 = scmp.ne.s32.totalorder %s116, %s117
      %p129 = scmp.eq.s32.totalorder %s23, 1
      %p130 = por %p128, %p129
      %p132 = scmp.ne.s32.totalorder %s117, %s131
      %p133 = scmp.eq.s32.totalorder %s23, 0
      %p134 = por %p132, %p133
      %s135 = ssub.s32 %s17, %s24
      %p136 = scmp.eq.s32.totalorder %s135, 0
      %s138 = sadd.s32 %s137, 1
      %s139 = scalar_select %p136, %s137, %s138
      %p142 = pneg %p136
      %p143 = scmp.eq.s32.totalorder %s17, 1
      %p144 = por %p142, %p143
      %p145 = scmp.ne.s32.totalorder %s137, %s140
      %p146 = scmp.eq.s32.totalorder %s17, 0
      %p147 = por %p145, %p146
      %p148 = scmp.ne.s32.totalorder %s137, %s140
      %p149 = scmp.eq.s32.totalorder %s22, 1
      %p150 = por %p148, %p149
      %p151 = scmp.ne.s32.totalorder %s140, %s141
      %p152 = scmp.eq.s32.totalorder %s22, 0
      %p153 = por %p151, %p152
      %p154 = scmp.ne.s32.totalorder %s140, %s141
      %p155 = scmp.eq.s32.totalorder %s23, 1
      %p156 = por %p154, %p155
      %p158 = scmp.ne.s32.totalorder %s141, %s157
      %p159 = scmp.eq.s32.totalorder %s23, 0
      %p160 = por %p158, %p159
      %p161 = scmp.le.s32.totalorder 1, %s17
      %p162 = scmp.lt.s32.totalorder %s17, 3
      %p163 = pnand %p161, %p162
      %p164 = pneg %p163
      // Predicated region
      $region9: #{tpu_custom_call.1} parent=5 // pred_check
        _
      $region10: #{tpu_custom_call.1} parent=5 // pred_check_branch
        %166 = sbr.rel (%p163) target = $region12
      $region11: #{tpu_custom_call.1} parent=5 // pred_region
        %s167 = ssub.s32 %s17, 1
        // Predicated region
        $region13: #{tpu_custom_call.1} parent=11 // pred_check
          %p168 = pneg %p64
        $region14: #{tpu_custom_call.1} parent=11 // pred_check_branch
          %170 = sbr.rel (%p168) target = $region16
        $region15: #{tpu_custom_call.1} parent=11 // pred_region
          _
        $region16: #{tpu_custom_call.1} parent=11 // pred_fallthru
          _
        // Predicated region
        $region17: #{tpu_custom_call.1} parent=11 // pred_check
          %p171 = pneg %p85
        $region18: #{tpu_custom_call.1} parent=11 // pred_check_branch
          %173 = sbr.rel (%p171) target = $region20
        $region19: #{tpu_custom_call.1} parent=11 // pred_region
          _
        $region20: #{tpu_custom_call.1} parent=11 // pred_fallthru
          _
        // Predicated region
        $region21: #{tpu_custom_call.1} parent=11 // pred_check
          %p174 = pneg %p106
        $region22: #{tpu_custom_call.1} parent=11 // pred_check_branch
          %176 = sbr.rel (%p174) target = $region24
        $region23: #{tpu_custom_call.1} parent=11 // pred_region
          _
        $region24: #{tpu_custom_call.1} parent=11 // pred_fallthru
          _
        // Predicated region
        $region25: #{tpu_custom_call.1} parent=11 // pred_check
          %p177 = pneg %p127
        $region26: #{tpu_custom_call.1} parent=11 // pred_check_branch
          %179 = sbr.rel (%p177) target = $region28
        $region27: #{tpu_custom_call.1} parent=11 // pred_region
          _
        $region28: #{tpu_custom_call.1} parent=11 // pred_fallthru
          _
      $region12: #{tpu_custom_call.1} parent=5 // pred_fallthru
        _
      %p180 = scmp.lt.s32.totalorder %s17, 2
      // Predicated region
      $region29: #{tpu_custom_call.1} parent=5 // pred_check
        %p181 = pneg %p180
      $region30: #{tpu_custom_call.1} parent=5 // pred_check_branch
        %183 = sbr.rel (%p181) target = $region32
      $region31: #{tpu_custom_call.1} parent=5 // pred_region
        // Predicated region
        $region33: #{tpu_custom_call.1} parent=31 // pred_check
          %p184 = pneg %p37
        $region34: #{tpu_custom_call.1} parent=31 // pred_check_branch
          %186 = sbr.rel (%p184) target = $region36
        $region35: #{tpu_custom_call.1} parent=31 // pred_region
          %s187 = sand.u32 %s27, 1
          %s188 = scalar_lea.sflag [#allocation3], %s187
          %s189 = sand.u32 %s27, 1
          %s190 = smul.addr %s189, 128
          %s191 = scalar_lea.vmem [#allocation2], %s190
          %193 = vsyncadd %s188, 0
          %s194 = smul.addr %s17, 16
          %s195 = smul.addr %s194, 8
          %s196 = scalar_lea.hbm %s0, %s195
          %s197 = sshll.u32 %s196, 4
          %s198 = int_to_ptr.hbm [resolvable:$true] %s197
          %s199 = sshll.u32 %s191, 4
          %s200 = int_to_ptr.vmem [resolvable:$true] %s199
          %205 = dma.hbm_to_vmem [thread:$0]  %s198, 2048, %s200, %s188, 256, 256, 16
        $region36: #{tpu_custom_call.1} parent=31 // pred_fallthru
          _
      $region32: #{tpu_custom_call.1} parent=5 // pred_fallthru
        _
      %p206 = scmp.le.s32.totalorder 1, %s17
      %p207 = scmp.lt.s32.totalorder %s17, 3
      %p208 = pnand %p206, %p207
      %p209 = pneg %p208
      // Predicated region
      $region37: #{tpu_custom_call.1} parent=5 // pred_check
        _
      $region38: #{tpu_custom_call.1} parent=5 // pred_check_branch
        %211 = sbr.rel (%p208) target = $region40
      $region39: #{tpu_custom_call.1} parent=5 // pred_region
        %s212 = ssub.s32 %s17, 1
        %s213 = sand.u32 %s30, 1
        %s214 = scalar_lea.sflag [#allocation3], %s213
        %s215 = sand.u32 %s30, 1
        %s216 = smul.addr %s215, 128
        %s217 = scalar_lea.vmem [#allocation2], %s216
        // Predicated region
        $region41: #{tpu_custom_call.1} parent=39 // pred_check
          %p218 = pneg %p43
        $region42: #{tpu_custom_call.1} parent=39 // pred_check_branch
          %220 = sbr.rel (%p218) target = $region44
        $region43: #{tpu_custom_call.1} parent=39 // pred_region
          %222 = dma.done %s214, 2048
        $region44: #{tpu_custom_call.1} parent=39 // pred_fallthru
          _
        %s223 = sand.u32 %s30, 1
        %s224 = scalar_lea.sflag [#allocation3], %s223
        %s225 = sand.u32 %s30, 1
        %s226 = smul.addr %s225, 128
        %s227 = scalar_lea.vmem [#allocation2], %s226
        %p228 = pneg %p43
        %p229 = pneg %p40
        %p230 = pneg %p64
        %p231 = pneg %p61
        %p232 = pneg %p85
        %p233 = pneg %p82
        %p234 = pneg %p106
        %p235 = pneg %p103
        %p236 = pneg %p127
        %p237 = pneg %p124
        %p238 = pneg %p153
        %p239 = pneg %p150
        %s240 = sand.u32 %s140, 1
        %s241 = scalar_lea.sflag [#allocation4], %s240
        %s242 = sand.u32 %s140, 1
        %s243 = smul.addr %s242, 128
        %s244 = scalar_lea.vmem [#allocation5], %s243
        %v245 = vld [vmem:[%s217] sm:$0xff]
        %v246 = vld [vmem:[%s217 + $0x8] sm:$0xff]
        %v247 = vld [vmem:[%s217 + $0x10] sm:$0xff]
        %v248 = vld [vmem:[%s217 + $0x18] sm:$0xff]
        %v249 = vld [vmem:[%s217 + $0x20] sm:$0xff]
        %v250 = vld [vmem:[%s217 + $0x28] sm:$0xff]
        %v251 = vld [vmem:[%s217 + $0x30] sm:$0xff]
        %v252 = vld [vmem:[%s217 + $0x38] sm:$0xff]
        %v253 = vld [vmem:[%s217 + $0x40] sm:$0xff]
        %v254 = vld [vmem:[%s217 + $0x48] sm:$0xff]
        %v255 = vld [vmem:[%s217 + $0x50] sm:$0xff]
        %v256 = vld [vmem:[%s217 + $0x58] sm:$0xff]
        %v257 = vld [vmem:[%s217 + $0x60] sm:$0xff]
        %v258 = vld [vmem:[%s217 + $0x68] sm:$0xff]
        %v259 = vld [vmem:[%s217 + $0x70] sm:$0xff]
        %v260 = vld [vmem:[%s217 + $0x78] sm:$0xff]
        %v261 = vadd.f32 %v245, %v246
        %262 = vadd.xlane.f32.xlu0 %v261
        %v263 = vpop.xlane.xlu0 %262
        %v264 = vadd.f32 %v247, %v248
        %265 = vadd.xlane.f32.xlu0 %v264
        %v266 = vpop.xlane.xlu0 %265
        %v267 = vadd.f32 %v249, %v250
        %268 = vadd.xlane.f32.xlu0 %v267
        %v269 = vpop.xlane.xlu0 %268
        %v270 = vadd.f32 %v251, %v252
        %271 = vadd.xlane.f32.xlu0 %v270
        %v272 = vpop.xlane.xlu0 %271
        %v273 = vadd.f32 %v253, %v254
        %274 = vadd.xlane.f32.xlu0 %v273
        %v275 = vpop.xlane.xlu0 %274
        %v276 = vadd.f32 %v255, %v256
        %277 = vadd.xlane.f32.xlu0 %v276
        %v278 = vpop.xlane.xlu0 %277
        %v279 = vadd.f32 %v257, %v258
        %280 = vadd.xlane.f32.xlu0 %v279
        %v281 = vpop.xlane.xlu0 %280
        %v282 = vadd.f32 %v259, %v260
        %283 = vadd.xlane.f32.xlu0 %v282
        %v284 = vpop.xlane.xlu0 %283
        %v285 = vrcp.pop 256.0
        %v286 = vmul.f32 256.0, %v285
        %v287 = vsub.f32 1.0, %v286
        %v288 = vmul.f32 %v285, %v287
        %v289 = vadd.f32 %v285, %v288
        %vm290 = vweird.f32 %v285
        %v291 = vsel %vm290, %v285, %v289
        %v292 = vmul.f32 %v263, %v291
        %v293 = vmul.f32 %v266, %v291
        %v294 = vmul.f32 %v269, %v291
        %v295 = vmul.f32 %v272, %v291
        %v296 = vmul.f32 %v275, %v291
        %v297 = vmul.f32 %v278, %v291
        %v298 = vmul.f32 %v281, %v291
        %v299 = vmul.f32 %v284, %v291
        %v300 = vmax.f32 %v245, %v246
        %301 = vmax.xlane.f32.xlu0 %v300
        %v302 = vpop.xlane.xlu0 %301
        %v303 = vmax.f32 %v247, %v248
        %304 = vmax.xlane.f32.xlu0 %v303
        %v305 = vpop.xlane.xlu0 %304
        %v306 = vmax.f32 %v249, %v250
        %307 = vmax.xlane.f32.xlu0 %v306
        %v308 = vpop.xlane.xlu0 %307
        %v309 = vmax.f32 %v251, %v252
        %310 = vmax.xlane.f32.xlu0 %v309
        %v311 = vpop.xlane.xlu0 %310
        %v312 = vmax.f32 %v253, %v254
        %313 = vmax.xlane.f32.xlu0 %v312
        %v314 = vpop.xlane.xlu0 %313
        %v315 = vmax.f32 %v255, %v256
        %316 = vmax.xlane.f32.xlu0 %v315
        %v317 = vpop.xlane.xlu0 %316
        %v318 = vmax.f32 %v257, %v258
        %319 = vmax.xlane.f32.xlu0 %v318
        %v320 = vpop.xlane.xlu0 %319
        %v321 = vmax.f32 %v259, %v260
        %322 = vmax.xlane.f32.xlu0 %v321
        %v323 = vpop.xlane.xlu0 %322
        %v324 = vld [vmem:[%s1] sm:$0xff]
        %v325 = vld [vmem:[%s1 + $0x8] sm:$0xff]
        %v326 = vld [vmem:[%s1 + $0x10] sm:$0xff]
        %v327 = vld [vmem:[%s1 + $0x18] sm:$0xff]
        %v328 = vld [vmem:[%s1 + $0x20] sm:$0xff]
        %v329 = vld [vmem:[%s1 + $0x28] sm:$0xff]
        %v330 = vld [vmem:[%s1 + $0x30] sm:$0xff]
        %v331 = vld [vmem:[%s1 + $0x38] sm:$0xff]
        %v332 = vld [vmem:[%s2] sm:$0x1]
        %v333 = vld [vmem:[%s3] sm:$0xf]
        %v334 = vld [vmem:[%s4] sm:$0x1]
        %v343 = vlaneseq
        %v344 = vand.u32 %v343, 127
        %v345 = vperm.slane %v292, %v344
        %v346 = vadd.s32 %v344, 4294967288
        %v347 = vperm.slane %v293, %v346
        %vm348 = vcmask 130112
        %v349 = vsel %vm348, %v347, %v345
        %v350 = vadd.s32 %v344, 4294967280
        %v351 = vperm.slane %v294, %v350
        %vm352 = vcmask 195712
        %v353 = vsel %vm352, %v351, %v349
        %v354 = vadd.s32 %v344, 4294967272
        %v355 = vperm.slane %v295, %v354
        %vm356 = vcmask 261312
        %v357 = vsel %vm356, %v355, %v353
        %v358 = vadd.s32 %v344, 4294967264
        %v359 = vperm.slane %v296, %v358
        %vm360 = vcmask 326912
        %v361 = vsel %vm360, %v359, %v357
        %v362 = vadd.s32 %v344, 4294967256
        %v363 = vperm.slane %v297, %v362
        %vm364 = vcmask 392512
        %v365 = vsel %vm364, %v363, %v361
        %v366 = vadd.s32 %v344, 4294967248
        %v367 = vperm.slane %v298, %v366
        %vm368 = vcmask 458112
        %v369 = vsel %vm368, %v367, %v365
        %v370 = vadd.s32 %v344, 4294967240
        %v371 = vperm.slane %v299, %v370
        %vm372 = vcmask 523712
        %v373 = vsel %vm372, %v371, %v369
        %v383 = vperm.slane %v302, %v344
        %v384 = vperm.slane %v305, %v346
        %v385 = vsel %vm348, %v384, %v383
        %v386 = vperm.slane %v308, %v350
        %v387 = vsel %vm352, %v386, %v385
        %v388 = vperm.slane %v311, %v354
        %v389 = vsel %vm356, %v388, %v387
        %v390 = vperm.slane %v314, %v358
        %v391 = vsel %vm360, %v390, %v389
        %v392 = vperm.slane %v317, %v362
        %v393 = vsel %vm364, %v392, %v391
        %v394 = vperm.slane %v320, %v366
        %v395 = vsel %vm368, %v394, %v393
        %v396 = vperm.slane %v323, %v370
        %v397 = vsel %vm372, %v396, %v395
        %vm399 = vcmask 1040384
        %v400 = vsel %vm399, %v373, %v397
        %v402 = vperm.slane %v332, 0
        %vm404 = vcmask 523264
        %v406 = vsel %vm404, %v400, 0
        %408 = vmatpush.msra.mxu0 0.0
        %409 = vmatpush.msra.mxu0 0.0
        %410 = vmatpush.msra.mxu0 0.0
        %411 = vmatpush.msra.mxu0 0.0
        %412 = vmatpush.msra.mxu0 0.0
        %413 = vmatpush.msra.mxu0 0.0
        %414 = vmatpush.msra.mxu0 0.0
        %415 = vmatpush.msra.mxu0 0.0
        %416 = vmatpush.msra.mxu0 %v331
        %417 = vmatpush.msra.mxu0 %v330
        %418 = vmatpush.msra.mxu0 %v329
        %419 = vmatpush.msra.mxu0 %v328
        %420 = vmatpush.msra.mxu0 %v327
        %421 = vmatpush.msra.mxu0 %v326
        %422 = vmatpush.msra.mxu0 %v325
        %423 = vmatpush.msra.mxu0 %v324
        %424 = vmatmul.f32.gmra.mxu0 %v406
        %v425 = vpop.f32.mrf.mxu0
        %v426 = vadd.f32 %v402, %v425
        %427 = vdwg.mxu0
        %vm428 = vcmp.ge.f32.partialorder %v426, 0.0
        %v429 = vmul.f32 %v426, 0.01
        %v430 = vsel %vm428, %v426, %v429
        %v432 = vperm.slane %v334, 0
        %vm434 = vcmask 31744
        %v436 = vsel %vm434, %v430, 0
        %vm438 = vcmask 1043456
        %v440 = vsel %vm438, %v333, 0
        %442 = vmatpush.msra.mxu0 0.0
        %443 = vmatpush.msra.mxu0 0.0
        %444 = vmatpush.msra.mxu0 0.0
        %445 = vmatpush.msra.mxu0 0.0
        %446 = vmatpush.msra.mxu0 0.0
        %447 = vmatpush.msra.mxu0 0.0
        %448 = vmatpush.msra.mxu0 0.0
        %449 = vmatpush.msra.mxu0 0.0
        %450 = vmatpush.msra.mxu0 0.0
        %451 = vmatpush.msra.mxu0 0.0
        %452 = vmatpush.msra.mxu0 0.0
        %453 = vmatpush.msra.mxu0 0.0
        %454 = vmatpush.msra.mxu0 0.0
        %455 = vmatpush.msra.mxu0 0.0
        %456 = vmatpush.msra.mxu0 0.0
        %457 = vmatpush.msra.mxu0 %v440
        %458 = vmatmul.f32.gmra.mxu0 %v436
        %v459 = vpop.f32.mrf.mxu0
        %v460 = vadd.f32 %v432, %v459
        %461 = vdwg.mxu0
        %v463 = vrot.slane %v460, 1
        %v465 = vadd.f32 %v460, %v463
        %v466 = vxor.u32 %v465, 2147483648
        %v467 = vmul.f32 %v466, 1.442695
        %v468 = vpow.pop %v467
        %v469 = vadd.f32 %v468, 1.0
        %v470 = vrcp.pop %v469
        %v471 = vmul.f32 %v469, %v470
        %v472 = vsub.f32 1.0, %v471
        %v473 = vmul.f32 %v470, %v472
        %v474 = vadd.f32 %v470, %v473
        %vm475 = vweird.f32 %v469
        %vm476 = vweird.f32 %v470
        %vm477 = vmor %vm475, %vm476
        %v478 = vsel %vm477, %v470, %v474
        %v479 = vand.u32 2147483647, %v469
        %vm480 = vcmp.eq.f32.partialorder %v479, 8.507059e+37
        %v481 = vand.u32 %v469, 2147483648
        %v482 = vor.u32 1.1754944e-38, %v481
        %v483 = vsel %vm480, %v482, %v478
        %v484 = vmul.f32 1.0, %v483
        %v485 = vperm.slane %v484, 0
        %v486 = vlaneseq
        %v487 = vshrl.u32 %v486, 7
        %489 = vset.pattern.permute.xlu0 %v487
        %490 = vperm.xlu0 %489, %v485
        %v491 = vpop.permute.xlu0 %490
        %v492 = vlaneseq
        %v493 = vshrl.u32 %v492, 7
        %v494 = vadd.s32 %v493, 8
        %495 = vset.pattern.permute.xlu0 %v494
        %496 = vperm.xlu0 %495, %v485
        %v497 = vpop.permute.xlu0 %496
        %v498 = vlaneseq
        %v499 = vshrl.u32 %v498, 7
        %v500 = vadd.s32 %v499, 16
        %501 = vset.pattern.permute.xlu0 %v500
        %502 = vperm.xlu0 %501, %v485
        %v503 = vpop.permute.xlu0 %502
        %v504 = vlaneseq
        %v505 = vshrl.u32 %v504, 7
        %v506 = vadd.s32 %v505, 24
        %507 = vset.pattern.permute.xlu0 %v506
        %508 = vperm.xlu0 %507, %v485
        %v509 = vpop.permute.xlu0 %508
        %v510 = vlaneseq
        %v511 = vshrl.u32 %v510, 7
        %v512 = vadd.s32 %v511, 32
        %513 = vset.pattern.permute.xlu0 %v512
        %514 = vperm.xlu0 %513, %v485
        %v515 = vpop.permute.xlu0 %514
        %v516 = vlaneseq
        %v517 = vshrl.u32 %v516, 7
        %v518 = vadd.s32 %v517, 40
        %519 = vset.pattern.permute.xlu0 %v518
        %520 = vperm.xlu0 %519, %v485
        %v521 = vpop.permute.xlu0 %520
        %v522 = vlaneseq
        %v523 = vshrl.u32 %v522, 7
        %v524 = vadd.s32 %v523, 48
        %525 = vset.pattern.permute.xlu0 %v524
        %526 = vperm.xlu0 %525, %v485
        %v527 = vpop.permute.xlu0 %526
        %v528 = vlaneseq
        %v529 = vshrl.u32 %v528, 7
        %v530 = vadd.s32 %v529, 56
        %531 = vset.pattern.permute.xlu0 %v530
        %532 = vperm.xlu0 %531, %v485
        %v533 = vpop.permute.xlu0 %532
        %v534 = vmul.f32 %v245, %v491
        %v535 = vmul.f32 %v246, %v491
        %v536 = vmul.f32 %v247, %v497
        %v537 = vmul.f32 %v248, %v497
        %v538 = vmul.f32 %v249, %v503
        %v539 = vmul.f32 %v250, %v503
        %v540 = vmul.f32 %v251, %v509
        %v541 = vmul.f32 %v252, %v509
        %v542 = vmul.f32 %v253, %v515
        %v543 = vmul.f32 %v254, %v515
        %v544 = vmul.f32 %v255, %v521
        %v545 = vmul.f32 %v256, %v521
        %v546 = vmul.f32 %v257, %v527
        %v547 = vmul.f32 %v258, %v527
        %v548 = vmul.f32 %v259, %v533
        %v549 = vmul.f32 %v260, %v533
        %550 = vst [vmem:[%s244] sm:$0xff] %v534
        %551 = vst [vmem:[%s244 + $0x8] sm:$0xff] %v535
        %552 = vst [vmem:[%s244 + $0x10] sm:$0xff] %v536
        %553 = vst [vmem:[%s244 + $0x18] sm:$0xff] %v537
        %554 = vst [vmem:[%s244 + $0x20] sm:$0xff] %v538
        %555 = vst [vmem:[%s244 + $0x28] sm:$0xff] %v539
        %556 = vst [vmem:[%s244 + $0x30] sm:$0xff] %v540
        %557 = vst [vmem:[%s244 + $0x38] sm:$0xff] %v541
        %558 = vst [vmem:[%s244 + $0x40] sm:$0xff] %v542
        %559 = vst [vmem:[%s244 + $0x48] sm:$0xff] %v543
        %560 = vst [vmem:[%s244 + $0x50] sm:$0xff] %v544
        %561 = vst [vmem:[%s244 + $0x58] sm:$0xff] %v545
        %562 = vst [vmem:[%s244 + $0x60] sm:$0xff] %v546
        %563 = vst [vmem:[%s244 + $0x68] sm:$0xff] %v547
        %564 = vst [vmem:[%s244 + $0x70] sm:$0xff] %v548
        %565 = vst [vmem:[%s244 + $0x78] sm:$0xff] %v549
        %s566 = sand.u32 %s140, 1
        %s567 = scalar_lea.sflag [#allocation4], %s566
        %s568 = sand.u32 %s140, 1
        %s569 = smul.addr %s568, 128
        %s570 = scalar_lea.vmem [#allocation5], %s569
        // Predicated region
        $region45: #{tpu_custom_call.1} parent=39 // pred_check
          %p571 = pneg %p150
        $region46: #{tpu_custom_call.1} parent=39 // pred_check_branch
          %573 = sbr.rel (%p571) target = $region48
        $region47: #{tpu_custom_call.1} parent=39 // pred_region
          %575 = vsyncadd %s567, 0
          %s576 = smul.addr %s22, 16
          %s577 = smul.addr %s576, 8
          %s578 = scalar_lea.hbm %s5, %s577
          %s579 = sshll.u32 %s570, 4
          %s580 = int_to_ptr.vmem [resolvable:$true] %s579
          %s581 = sshll.u32 %s578, 4
          %s582 = int_to_ptr.hbm [resolvable:$true] %s581
          %587 = dma.vmem_to_hbm [thread:$0]  %s580, 2048, %s582, %s567, 256, 256, 16
        $region48: #{tpu_custom_call.1} parent=39 // pred_fallthru
          _
      $region40: #{tpu_custom_call.1} parent=5 // pred_fallthru
        _
      %p588 = scmp.le.s32.totalorder 2, %s17
      // Predicated region
      $region49: #{tpu_custom_call.1} parent=5 // pred_check
        %p589 = pneg %p588
      $region50: #{tpu_custom_call.1} parent=5 // pred_check_branch
        %591 = sbr.rel (%p589) target = $region52
      $region51: #{tpu_custom_call.1} parent=5 // pred_region
        %s592 = ssub.s32 %s17, 2
        // Predicated region
        $region53: #{tpu_custom_call.1} parent=51 // pred_check
          %p593 = pneg %p156
        $region54: #{tpu_custom_call.1} parent=51 // pred_check_branch
          %595 = sbr.rel (%p593) target = $region56
        $region55: #{tpu_custom_call.1} parent=51 // pred_region
          %s596 = sand.u32 %s141, 1
          %s597 = scalar_lea.sflag [#allocation4], %s596
          %s598 = sand.u32 %s141, 1
          %s599 = smul.addr %s598, 128
          %s600 = scalar_lea.vmem [#allocation5], %s599
          %602 = dma.done %s597, 2048
        $region56: #{tpu_custom_call.1} parent=51 // pred_fallthru
          _
      $region52: #{tpu_custom_call.1} parent=5 // pred_fallthru
        _
    $region6: #{tpu_custom_call.1} parent=1 // loop_footer
      %s21 = sadd.s32 1, %s17
    $region7: #{tpu_custom_call.1} parent=1 // loop_footer_branch
      %16 = sbr.rel target = $region3
    $region8: #{tpu_custom_call.1} parent=1 // loop_exit
      _
    %603 = vsyncpa [#allocation3], 1
    %s604 = scalar_lea.sflag [#allocation3], 1
    %605 = vsyncpa %s604, 1
    %606 = vsyncpa [#allocation4], 1
    %s607 = scalar_lea.sflag [#allocation4], 1
    %608 = vsyncpa %s607, 1

</llo_original>
